<compile_context>
chip_gen: v7x
topology: tpu7x:2x2x1
jax: 0.10.0
libtpu: 0.0.40
codegen_flags: <defaults>
</compile_context>

<pallas_src>
import math
import functools

import jax
import jax.numpy as jnp
from jax.experimental import pallas as pl
from jax.experimental.pallas import tpu as pltpu


# ----------------------------------------------------------------------------
# pe table (same math as the PyTorch __init__; stored 2D == torch pe[:, 0, :])
# ----------------------------------------------------------------------------
def make_positional_encoding_table(d_model: int, max_len: int = 5000) -> jnp.ndarray:
    position = jnp.arange(max_len, dtype=jnp.float32)[:, None]                 # (max_len, 1)
    div_term = jnp.exp(
        jnp.arange(0, d_model, 2, dtype=jnp.float32) * (-math.log(10000.0) / d_model)
    )                                                                          # (d_model/2,)
    pe = jnp.zeros((max_len, d_model), dtype=jnp.float32)
    pe = pe.at[:, 0::2].set(jnp.sin(position * div_term))
    pe = pe.at[:, 1::2].set(jnp.cos(position * div_term))
    return pe


# ----------------------------------------------------------------------------
# Kernels (batch, d_model, p baked in as Python constants)
# ----------------------------------------------------------------------------
def _make_add_kernel(batch: int, d_model: int):
    def kernel(x_ref, pe_ref, o_ref):
        # x_ref/o_ref: (s_blk, batch*d_model); pe_ref: (s_blk, d_model)
        pe_blk = pe_ref[...].astype(x_ref.dtype)
        # Static unrolled broadcast-add over the batch chunks of the flattened
        # lane axis.  For d_model % 128 == 0 these slices are fully lane
        # aligned (dense loads/stores); for small demo d_model they fall back
        # to masked slices, which is unavoidable without relayout.
        for b in range(batch):
            sl = slice(b * d_model, (b + 1) * d_model)
            o_ref[:, sl] = x_ref[:, sl] + pe_blk
    return kernel


def _make_add_dropout_kernel(batch: int, d_model: int, p: float):
    scale = 1.0 / (1.0 - p)          # baked Python float (p < 1 guaranteed by wrapper)

    def kernel(x_ref, pe_ref, u_ref, o_ref):
        pe_blk = pe_ref[...].astype(x_ref.dtype)
        for b in range(batch):
            sl = slice(b * d_model, (b + 1) * d_model)
            y = x_ref[:, sl] + pe_blk
            keep = u_ref[:, sl] >= p                       # inverted dropout
            o_ref[:, sl] = jnp.where(keep, y * scale, 0.0)
    return kernel


# ----------------------------------------------------------------------------
# Wrapper
# ----------------------------------------------------------------------------
def _round_up(n: int, m: int) -> int:
    return ((n + m - 1) // m) * m


def _pick_seq_block(seq_len: int, row_bytes: int, target_bytes: int = 1 << 20) -> int:
    """Rows (sequence positions) per tile: multiple of 8, ~target_bytes of x."""
    rows = max(1, target_bytes // max(row_bytes, 1))
    rows = max(8, (rows // 8) * 8)
    rows = min(rows, _round_up(seq_len, 8))
    return int(rows)


@functools.partial(jax.jit, static_argnames=("p", "training", "seq_block"))
def positional_encoding_forward(x, pe, key, *, p: float = 0.1,
                                training: bool = False, seq_block=None):
    """x: (S, B, D); pe: (max_len, D) [or (max_len, 1, D)]; key: jax PRNG key."""
    S, B, D = x.shape
    if pe.ndim == 3:                       # accept torch-style (max_len, 1, D)
        pe = pe[:, 0, :]
    assert pe.shape[1] == D

    # torch.nn.Dropout(p>=1) zeroes everything; also avoids 1/(1-p) div-by-zero.
    if training and p >= 1.0:
        return jnp.zeros_like(x)
    use_dropout = bool(training and p > 0.0)

    # Free layout plumbing: merge (B, D) into a dense lane axis.
    x2 = x.reshape(S, B * D)
    row_bytes = B * D * x.dtype.itemsize
    s_blk = int(seq_block) if seq_block is not None else _pick_seq_block(S, row_bytes)
    grid = (pl.cdiv(S, s_blk),)

    x_spec = pl.BlockSpec((s_blk, B * D), lambda i: (i, 0))
    pe_spec = pl.BlockSpec((s_blk, D), lambda i: (i, 0))      # full table; no pe[:S] slice
    out_spec = pl.BlockSpec((s_blk, B * D), lambda i: (i, 0))

    compiler_params = pltpu.CompilerParams(
        dimension_semantics=("parallel",),          # per-block work is independent
        vmem_limit_bytes=32 * 1024 * 1024,          # explicit; headroom on v7x/v5e
    )
    out_shape = jax.ShapeDtypeStruct((S, B * D), x.dtype)

    if use_dropout:
        u = jax.random.uniform(key, (S, B * D), dtype=jnp.float32)
        out2 = pl.pallas_call(
            _make_add_dropout_kernel(B, D, float(p)),
            out_shape=out_shape,
            grid=grid,
            in_specs=[x_spec, pe_spec, x_spec],
            out_specs=out_spec,
            compiler_params=compiler_params,
        )(x2, pe, u)
    else:
        out2 = pl.pallas_call(
            _make_add_kernel(B, D),
            out_shape=out_shape,
            grid=grid,
            in_specs=[x_spec, pe_spec],
            out_specs=out_spec,
            compiler_params=compiler_params,
        )(x2, pe)

    return out2.reshape(S, B, D)


# ----------------------------------------------------------------------------
# Demo / self-check
# ----------------------------------------------------------------------------
if __name__ == "__main__":
    d_model = 32
    seq_len = 8
    batch = 2
    max_len = 64           # small table for the demo (module default is 5000)
    dropout_p = 0.1

    root = jax.random.PRNGKey(0)
    kx, kdrop = jax.random.split(root)
    x = jax.random.normal(kx, (seq_len, batch, d_model), dtype=jnp.float32)
    pe = make_positional_encoding_table(d_model, max_len)

    # Eval mode: dropout is identity -> deterministic check vs reference.
    out_eval = positional_encoding_forward(x, pe, kdrop, p=dropout_p, training=False)
    out_eval = jax.block_until_ready(out_eval)
    ref = x + pe[:seq_len][:, None, :]
    assert out_eval.shape == (seq_len, batch, d_model)
    assert jnp.allclose(out_eval, ref, atol=1e-6), "eval-mode mismatch vs reference"

    # Training mode: kept values must equal ref / (1 - p); dropped values are 0.
    out_train = positional_encoding_forward(x, pe, kdrop, p=dropout_p, training=True)
    out_train = jax.block_until_ready(out_train)
    assert out_train.shape == (seq_len, batch, d_model)
    kept = out_train != 0.0
    assert jnp.allclose(jnp.where(kept, out_train * (1.0 - dropout_p), 0.0),
                        jnp.where(kept, ref, 0.0), atol=1e-5), "train-mode mismatch"

    print("KERNEL_OK")
</pallas_src>

<mosaic_0001>
module attributes {stable_mosaic.version = 11 : i64} {
  func.func @kernel(%arg0: i32, %arg1: memref<8x64xf32, #tpu.memory_space<vmem>>, %arg2: memref<8x32xf32, #tpu.memory_space<vmem>>, %arg3: memref<8x64xf32, #tpu.memory_space<vmem>>) attributes {dimension_semantics = [#tpu.dimension_semantics<parallel>], iteration_bounds = array<i64: 1>, scalar_prefetch = 0 : i64, scratch_operands = 0 : i64, tpu.core_type = #tpu.core_type<tc>, window_params = [{transform_indices = @transform_0, window_bounds = array<i64: 8, 64>}, {transform_indices = @transform_1, window_bounds = array<i64: 8, 32>}, {transform_indices = @transform_2, window_bounds = array<i64: 8, 64>}]} {
    %c0 = arith.constant 0 : index
    %c0_0 = arith.constant 0 : index
    %0 = vector.load %arg2[%c0, %c0_0] : memref<8x32xf32, #tpu.memory_space<vmem>>, vector<8x32xf32>
    %c0_1 = arith.constant 0 : index
    %c0_2 = arith.constant 0 : index
    %1 = vector.load %arg1[%c0_1, %c0_2] : memref<8x64xf32, #tpu.memory_space<vmem>>, vector<8x32xf32>
    %2 = arith.addf %1, %0 : vector<8x32xf32>
    %c0_3 = arith.constant 0 : index
    %c0_4 = arith.constant 0 : index
    %3 = vector.load %arg3[%c0_3, %c0_4] : memref<8x64xf32, #tpu.memory_space<vmem>>, vector<8x32xf32>
    tpu.vector_store %arg3[%c0_3, %c0_4], %2 {strides = array<i32>} : memref<8x64xf32, #tpu.memory_space<vmem>>, vector<8x32xf32>,
    %c0_5 = arith.constant 0 : index
    %c32 = arith.constant 32 : index
    %4 = vector.load %arg1[%c0_5, %c32] : memref<8x64xf32, #tpu.memory_space<vmem>>, vector<8x32xf32>
    %5 = arith.addf %4, %0 : vector<8x32xf32>
    %c0_6 = arith.constant 0 : index
    %c32_7 = arith.constant 32 : index
    %6 = vector.load %arg3[%c0_6, %c32_7] : memref<8x64xf32, #tpu.memory_space<vmem>>, vector<8x32xf32>
    tpu.vector_store %arg3[%c0_6, %c32_7], %5 {strides = array<i32>} : memref<8x64xf32, #tpu.memory_space<vmem>>, vector<8x32xf32>,
    return
  }
  func.func @transform_0(%arg0: i32) -> (i32, i32) {
    %c0_i32 = arith.constant 0 : i32
    %c0_i32_0 = arith.constant 0 : i32
    return %arg0, %c0_i32 : i32, i32
  }
  func.func @transform_1(%arg0: i32) -> (i32, i32) {
    %c0_i32 = arith.constant 0 : i32
    %c0_i32_0 = arith.constant 0 : i32
    return %arg0, %c0_i32 : i32, i32
  }
  func.func @transform_2(%arg0: i32) -> (i32, i32) {
    %c0_i32 = arith.constant 0 : i32
    %c0_i32_0 = arith.constant 0 : i32
    return %arg0, %c0_i32 : i32, i32
  }
}

</mosaic_0001>

<llo_original>
// kernel: positional_encoding_forward.1
$region0: #{positional_encoding_forward.1}
  #allocation0 [shape = 'u32[]', space=smem, size = 0x4, offset = 0x4, fixed_abs, tag = 'smem constant byte address 0x4 - core index']
  #allocation1 [shape = 'u32[144,128]{1,0:T(1,128)}', space=vmem, size = 0x12000, scoped, tag = 'internal scratch']
  %s0 = inlined_call_operand.vmem [shape: f32[8,64], index: 0, kind: input, shape index: {}]
  %s1 = inlined_call_operand.vmem [shape: f32[64,32], index: 1, kind: input, shape index: {}]
  %s2 = inlined_call_operand.vmem [shape: f32[8,64], index: 2, kind: output, shape index: {}]
  %s3 = sld [smem:[#allocation0]]
  $region18: #{positional_encoding_forward.1} parent=0
    _
  %s5 = ssub.s32 1, %s3
  %s6 = scalar_select 0, %s5, %s3
  // Predicated region
  $region2: #{positional_encoding_forward.1} parent=0 // pred_check
    _
  $region3: #{positional_encoding_forward.1} parent=0 // pred_check_branch
    %8 = sbr.rel (0) target = $region5
  $region4: #{positional_encoding_forward.1} parent=0 // pred_region
    _
  $region5: #{positional_encoding_forward.1} parent=0 // pred_fallthru
    _
  // Predicated region
  $region6: #{positional_encoding_forward.1} parent=0 // pred_check
    _
  $region7: #{positional_encoding_forward.1} parent=0 // pred_check_branch
    %10 = sbr.rel (0) target = $region9
  $region8: #{positional_encoding_forward.1} parent=0 // pred_region
    _
  $region9: #{positional_encoding_forward.1} parent=0 // pred_fallthru
    _
  %v11 = vld [vmem:[%s1] sm:$0xff]
  %v12 = vld [vmem:[%s0] sm:$0xff]
  %v13 = vadd.f32 %v12, %v11
  %vm14 = vcmask 261120
  %15 = vst.msk [vmem:[%s2] sm:$0xff] %vm14, %v13
  %v16 = vld [vmem:[%s0] sm:$0xff]
  %18 = vrot.lane.b32.xlu0 %v11, 32
  %v19 = vpop.permute.xlu0 %18
  %v21 = vadd.f32 %v16, %v19
  %vm22 = vcmask 523520
  %23 = vst.msk [vmem:[%s2] sm:$0xff] %vm22, %v21
  // Predicated region
  $region10: #{positional_encoding_forward.1} parent=0 // pred_check
    _
  $region11: #{positional_encoding_forward.1} parent=0 // pred_check_branch
    %25 = sbr.rel (0) target = $region13
  $region12: #{positional_encoding_forward.1} parent=0 // pred_region
    _
  $region13: #{positional_encoding_forward.1} parent=0 // pred_fallthru
    _
  // Predicated region
  $region14: #{positional_encoding_forward.1} parent=0 // pred_check
    _
  $region15: #{positional_encoding_forward.1} parent=0 // pred_check_branch
    %27 = sbr.rel (0) target = $region17
  $region16: #{positional_encoding_forward.1} parent=0 // pred_region
    _
  $region17: #{positional_encoding_forward.1} parent=0 // pred_fallthru
    _

</llo_original>
